<compile_context>
chip_gen: v5e
topology: v5e:2x2
jax: 0.10.0
libtpu: 0.0.40
codegen_flags: <defaults>
</compile_context>

<pallas_src>
import functools

import jax
import jax.numpy as jnp
from jax import lax
from jax.experimental import pallas as pl
from jax.experimental.pallas import tpu as pltpu


def _round_up(x, m):
    return ((x + m - 1) // m) * m


def _mlp_attention_kernel(q_ref, m_ref, wq_ref, bq_ref, wm_ref, v_ref,
                          wmem_ref, w_ref, scores_ref, *, tlm, n_lm_chunks):
    f32 = jnp.float32
    q = q_ref[0]                       # (TLq, Qp)   (f32 or bf16)
    m = m_ref[0]                       # (Lm,  M)    (f32 or bf16)
    v = v_ref[...]                     # (1, H) f32

    # Row-batched projections on the MXU, f32 accumulation.
    qh = jnp.dot(q, wq_ref[...], preferred_element_type=f32) + bq_ref[...]   # (TLq, H)
    mh = jnp.dot(m, wm_ref[...], preferred_element_type=f32)                 # (Lm,  H)

    tlq = qh.shape[0]
    # Additive score  s[i, j] = v . tanh(qh[i] + mh[j]),  chunked over Lm so
    # only a (TLm, H) tanh slab is live at a time (no (Lq, Lm, H) tensor).
    for c in range(n_lm_chunks):                        # static unroll
        mh_c = mh[c * tlm:(c + 1) * tlm, :]             # (TLm, H)
        for i in range(tlq):                            # static unroll (TLq small)
            hid = jnp.tanh(qh[i:i + 1, :] + mh_c)       # (TLm, H)  EUP tanh, f32
            # v-contraction on the MXU: (1,H) x (TLm,H)^T -> (1, TLm), lane-dense.
            s = lax.dot_general(v, hid, (((1,), (1,)), ((), ())),
                                preferred_element_type=f32)
            scores_ref[i:i + 1, c * tlm:(c + 1) * tlm] = s

    # Numerically stable softmax over the full (VMEM-resident) memory axis.
    attn = scores_ref[...]                              # (TLq, Lm) f32
    amax = jnp.max(attn, axis=-1, keepdims=True)
    e = jnp.exp(attn - amax)
    denom = jnp.sum(e, axis=-1, keepdims=True)
    w = e * pl.reciprocal(denom, approx=True)           # avoid EUP divide

    w_ref[0] = w.astype(w_ref.dtype)
    # weighted_memory = weights @ memory   (MXU)
    wmem_ref[0] = jnp.dot(w.astype(m.dtype), m,
                          preferred_element_type=f32).astype(wmem_ref.dtype)


def mlp_attention(query, memory, wq, bq, wm, v, *,
                  use_bf16_matmul=False,     # recommended True on v6e/v7x, keep False on v5e
                  max_tlq=64,                # Lq rows per grid step (bounds static unroll)
                  lm_chunk_cap=256):         # Lm chunk size inside the kernel
    """Pallas equivalent of Attention(mode='mlp').forward(query, memory).

    query:  (B, Lq, Q) f32      memory: (B, Lm, M) f32
    wq: (H, Q), bq: (H,)   -- linear_query (PyTorch (out, in) layout)
    wm: (H, M)             -- linear_memory
    v:  (1, H)             -- v
    returns (weighted_memory (B, Lq, M) f32, weights (B, Lq, Lm) f32)
    """
    query = jnp.asarray(query, jnp.float32)
    memory = jnp.asarray(memory, jnp.float32)
    B, Lq, Q = query.shape
    Bm, Lm, M = memory.shape
    assert Bm == B
    H = wq.shape[0]
    assert wq.shape == (H, Q) and wm.shape == (H, M)

    # ---- host-side layout prep -------------------------------------------
    # Lane-dense query: zero-pad Q up to a multiple of 128; zero rows of Wq^T
    # keep the math identical.
    Qp = _round_up(Q, 128)
    wq_t = jnp.zeros((Qp, H), jnp.float32).at[:Q, :].set(jnp.asarray(wq, jnp.float32).T)
    wm_t = jnp.asarray(wm, jnp.float32).T                 # (M, H)
    bq2 = jnp.asarray(bq, jnp.float32).reshape(1, H)
    v2 = jnp.asarray(v, jnp.float32).reshape(1, H)
    if Qp != Q:
        query = jnp.pad(query, ((0, 0), (0, 0), (0, Qp - Q)))

    # Lq tiling (second grid axis); pad rows with zeros, slice results back.
    TLq = min(_round_up(Lq, 8), max_tlq)
    Lq_pad = _round_up(Lq, TLq)
    if Lq_pad != Lq:
        query = jnp.pad(query, ((0, 0), (0, Lq_pad - Lq), (0, 0)))
    n_q_tiles = Lq_pad // TLq

    # Lm chunk size used inside the kernel (bounds the live tanh slab).
    TLm = Lm
    for cand in (256, 128, 64, 32, 16, 8):
        if cand <= min(Lm, lm_chunk_cap) and Lm % cand == 0:
            TLm = cand
            break
    n_lm_chunks = Lm // TLm

    # bf16 matmul operands (f32 accumulation); elementwise path stays f32.
    mm_dtype = jnp.bfloat16 if use_bf16_matmul else jnp.float32
    q_in = query.astype(mm_dtype)
    m_in = memory.astype(mm_dtype)
    wq_in = wq_t.astype(mm_dtype)
    wm_in = wm_t.astype(mm_dtype)

    kernel = functools.partial(_mlp_attention_kernel, tlm=TLm,
                               n_lm_chunks=n_lm_chunks)

    out_shapes = (
        jax.ShapeDtypeStruct((B, Lq_pad, M), jnp.float32),    # weighted_memory
        jax.ShapeDtypeStruct((B, Lq_pad, Lm), jnp.float32),   # weights
    )

    # Weight operands have constant index maps; Pallas skips re-DMA for them,
    # and their VMEM footprint (<1 MiB here) makes extra de-buffering moot.
    grid_spec = pltpu.PrefetchScalarGridSpec(
        num_scalar_prefetch=0,
        grid=(B, n_q_tiles),
        in_specs=[
            pl.BlockSpec((1, TLq, Qp), lambda b, t: (b, t, 0)),   # query tile
            pl.BlockSpec((1, Lm, M), lambda b, t: (b, 0, 0)),     # memory (full per batch)
            pl.BlockSpec((Qp, H), lambda b, t: (0, 0)),           # Wq^T (padded)
            pl.BlockSpec((1, H), lambda b, t: (0, 0)),            # bq
            pl.BlockSpec((M, H), lambda b, t: (0, 0)),            # Wm^T
            pl.BlockSpec((1, H), lambda b, t: (0, 0)),            # v
        ],
        out_specs=[
            pl.BlockSpec((1, TLq, M), lambda b, t: (b, t, 0)),
            pl.BlockSpec((1, TLq, Lm), lambda b, t: (b, t, 0)),
        ],
        scratch_shapes=[pltpu.VMEM((TLq, Lm), jnp.float32)],      # raw scores
    )

    wmem, w = pl.pallas_call(
        kernel,
        out_shape=out_shapes,
        grid_spec=grid_spec,
        compiler_params=pltpu.CompilerParams(
            dimension_semantics=("parallel", "parallel"),
            vmem_limit_bytes=48 * 1024 * 1024,   # headroom below v7x's 64 MiB
        ),
    )(q_in, m_in, wq_in, bq2, wm_in, v2)

    if Lq_pad != Lq:
        wmem = wmem[:, :Lq, :]
        w = w[:, :Lq, :]
    return wmem, w


def _reference(query, memory, wq, bq, wm, v):
    # Pure-JAX reference mirroring the PyTorch forward (mode='mlp', no mask).
    qh = jnp.einsum('blq,hq->blh', query, wq) + bq
    mh = jnp.einsum('bmk,hk->bmh', memory, wm)
    hidden = jnp.tanh(qh[:, :, None, :] + mh[:, None, :, :])
    attn = jnp.einsum('blmh,oh->blmo', hidden, v)[..., 0]
    weights = jax.nn.softmax(attn, axis=-1)
    weighted = jnp.einsum('blm,bmk->blk', weights, memory)
    return weighted, weights


if __name__ == "__main__":
    # Small shapes consistent with the module's forward signature.
    B, Lq, Lm = 2, 8, 128
    Q, M, H = 64, 128, 128        # query_size, memory_size, hidden_size

    key = jax.random.PRNGKey(0)
    k1, k2, k3, k4, k5, k6 = jax.random.split(key, 6)

    query = jax.random.normal(k1, (B, Lq, Q), dtype=jnp.float32)
    memory = jax.random.normal(k2, (B, Lm, M), dtype=jnp.float32)

    # Parameter shapes follow nn.Linear in Attention.__init__ (mode='mlp').
    wq = 0.1 * jax.random.normal(k3, (H, Q), dtype=jnp.float32)   # linear_query.weight
    bq = 0.1 * jax.random.normal(k4, (H,), dtype=jnp.float32)     # linear_query.bias
    wm = 0.1 * jax.random.normal(k5, (H, M), dtype=jnp.float32)   # linear_memory.weight
    v = 0.1 * jax.random.normal(k6, (1, H), dtype=jnp.float32)    # v.weight

    weighted_memory, weights = mlp_attention(query, memory, wq, bq, wm, v)
    jax.block_until_ready((weighted_memory, weights))

    ref_wm, ref_w = _reference(query, memory, wq, bq, wm, v)
    assert weighted_memory.shape == ref_wm.shape and weights.shape == ref_w.shape
    # Tolerance leaves margin for the approximate-reciprocal softmax.
    assert jnp.allclose(weighted_memory, ref_wm, atol=5e-3, rtol=5e-3)
    assert jnp.allclose(weights, ref_w, atol=5e-3, rtol=5e-3)

    print("KERNEL_OK")
</pallas_src>

<mosaic_0001>
module attributes {stable_mosaic.version = 11 : i64} {
  func.func @_mlp_attention_kernel(%arg0: i32, %arg1: i32, %arg2: memref<1x8x128xf32, #tpu.memory_space<vmem>>, %arg3: memref<1x128x128xf32, #tpu.memory_space<vmem>>, %arg4: memref<128x128xf32, #tpu.memory_space<vmem>>, %arg5: memref<1x128xf32, #tpu.memory_space<vmem>>, %arg6: memref<128x128xf32, #tpu.memory_space<vmem>>, %arg7: memref<1x128xf32, #tpu.memory_space<vmem>>, %arg8: memref<1x8x128xf32, #tpu.memory_space<vmem>>, %arg9: memref<1x8x128xf32, #tpu.memory_space<vmem>>, %arg10: memref<8x128xf32, #tpu.memory_space<vmem>>) attributes {dimension_semantics = [#tpu.dimension_semantics<parallel>, #tpu.dimension_semantics<parallel>], iteration_bounds = array<i64: 2, 1>, scalar_prefetch = 0 : i64, scratch_operands = 1 : i64, tpu.core_type = #tpu.core_type<tc>, window_params = [{transform_indices = @transform_0, window_bounds = array<i64: 1, 8, 128>}, {transform_indices = @transform_1, window_bounds = array<i64: 1, 128, 128>}, {pipeline_mode = #tpu.pipeline_mode<synchronous>, transform_indices = @transform_2, window_bounds = array<i64: 128, 128>}, {pipeline_mode = #tpu.pipeline_mode<synchronous>, transform_indices = @transform_3, window_bounds = array<i64: 1, 128>}, {pipeline_mode = #tpu.pipeline_mode<synchronous>, transform_indices = @transform_4, window_bounds = array<i64: 128, 128>}, {pipeline_mode = #tpu.pipeline_mode<synchronous>, transform_indices = @transform_5, window_bounds = array<i64: 1, 128>}, {transform_indices = @transform_6, window_bounds = array<i64: 1, 8, 128>}, {transform_indices = @transform_7, window_bounds = array<i64: 1, 8, 128>}]} {
    %c0 = arith.constant 0 : index
    %c0_0 = arith.constant 0 : index
    %c0_1 = arith.constant 0 : index
    %0 = vector.load %arg2[%c0, %c0_0, %c0_1] : memref<1x8x128xf32, #tpu.memory_space<vmem>>, vector<1x8x128xf32>
    %1 = vector.shape_cast %0 : vector<1x8x128xf32> to vector<8x128xf32>
    %c0_2 = arith.constant 0 : index
    %c0_3 = arith.constant 0 : index
    %c0_4 = arith.constant 0 : index
    %2 = vector.load %arg3[%c0_2, %c0_3, %c0_4] : memref<1x128x128xf32, #tpu.memory_space<vmem>>, vector<1x128x128xf32>
    %3 = vector.shape_cast %2 : vector<1x128x128xf32> to vector<128x128xf32>
    %c0_5 = arith.constant 0 : index
    %c0_6 = arith.constant 0 : index
    %4 = vector.load %arg7[%c0_5, %c0_6] : memref<1x128xf32, #tpu.memory_space<vmem>>, vector<1x128xf32>
    %c0_7 = arith.constant 0 : index
    %c0_8 = arith.constant 0 : index
    %5 = vector.load %arg4[%c0_7, %c0_8] : memref<128x128xf32, #tpu.memory_space<vmem>>, vector<128x128xf32>
    %cst = arith.constant dense<0.000000e+00> : vector<8x128xf32>
    %6 = tpu.matmul %1, %5, %cst {dimension_numbers = #tpu.dot_dimension_numbers<[1], [0], [0], [1], [0, 0, 1, 1], [], []>} : vector<8x128xf32>, vector<128x128xf32>, vector<8x128xf32> -> vector<8x128xf32>
    %c0_9 = arith.constant 0 : index
    %c0_10 = arith.constant 0 : index
    %7 = vector.load %arg5[%c0_9, %c0_10] : memref<1x128xf32, #tpu.memory_space<vmem>>, vector<1x128xf32>
    %8 = vector.broadcast %7 : vector<1x128xf32> to vector<8x128xf32>
    %9 = arith.addf %6, %8 : vector<8x128xf32>
    %c0_11 = arith.constant 0 : index
    %c0_12 = arith.constant 0 : index
    %10 = vector.load %arg6[%c0_11, %c0_12] : memref<128x128xf32, #tpu.memory_space<vmem>>, vector<128x128xf32>
    %cst_13 = arith.constant dense<0.000000e+00> : vector<128x128xf32>
    %11 = tpu.matmul %3, %10, %cst_13 {dimension_numbers = #tpu.dot_dimension_numbers<[1], [0], [0], [1], [0, 0, 1, 1], [], []>} : vector<128x128xf32>, vector<128x128xf32>, vector<128x128xf32> -> vector<128x128xf32>
    %12 = vector.extract_strided_slice %9 {offsets = [0, 0], sizes = [1, 128], strides = [1, 1]} : vector<8x128xf32> to vector<1x128xf32>
    %13 = vector.broadcast %12 : vector<1x128xf32> to vector<128x128xf32>
    %14 = arith.addf %13, %11 : vector<128x128xf32>
    %15 = math.tanh %14 : vector<128x128xf32>
    %cst_14 = arith.constant dense<0.000000e+00> : vector<1x128xf32>
    %16 = tpu.matmul %4, %15, %cst_14 {dimension_numbers = #tpu.dot_dimension_numbers<[1], [1], [0], [0], [0, 0, 1, 0], [], []>} : vector<1x128xf32>, vector<128x128xf32>, vector<1x128xf32> -> vector<1x128xf32>
    %c0_15 = arith.constant 0 : index
    %c0_16 = arith.constant 0 : index
    %17 = vector.load %arg10[%c0_15, %c0_16] : memref<8x128xf32, #tpu.memory_space<vmem>>, vector<1x128xf32>
    tpu.vector_store %arg10[%c0_15, %c0_16], %16 {strides = array<i32>} : memref<8x128xf32, #tpu.memory_space<vmem>>, vector<1x128xf32>,
    %18 = vector.extract_strided_slice %9 {offsets = [1, 0], sizes = [1, 128], strides = [1, 1]} : vector<8x128xf32> to vector<1x128xf32>
    %19 = vector.broadcast %18 : vector<1x128xf32> to vector<128x128xf32>
    %20 = arith.addf %19, %11 : vector<128x128xf32>
    %21 = math.tanh %20 : vector<128x128xf32>
    %cst_17 = arith.constant dense<0.000000e+00> : vector<1x128xf32>
    %22 = tpu.matmul %4, %21, %cst_17 {dimension_numbers = #tpu.dot_dimension_numbers<[1], [1], [0], [0], [0, 0, 1, 0], [], []>} : vector<1x128xf32>, vector<128x128xf32>, vector<1x128xf32> -> vector<1x128xf32>
    %c1 = arith.constant 1 : index
    %c0_18 = arith.constant 0 : index
    %23 = vector.load %arg10[%c1, %c0_18] : memref<8x128xf32, #tpu.memory_space<vmem>>, vector<1x128xf32>
    tpu.vector_store %arg10[%c1, %c0_18], %22 {strides = array<i32>} : memref<8x128xf32, #tpu.memory_space<vmem>>, vector<1x128xf32>,
    %24 = vector.extract_strided_slice %9 {offsets = [2, 0], sizes = [1, 128], strides = [1, 1]} : vector<8x128xf32> to vector<1x128xf32>
    %25 = vector.broadcast %24 : vector<1x128xf32> to vector<128x128xf32>
    %26 = arith.addf %25, %11 : vector<128x128xf32>
    %27 = math.tanh %26 : vector<128x128xf32>
    %cst_19 = arith.constant dense<0.000000e+00> : vector<1x128xf32>
    %28 = tpu.matmul %4, %27, %cst_19 {dimension_numbers = #tpu.dot_dimension_numbers<[1], [1], [0], [0], [0, 0, 1, 0], [], []>} : vector<1x128xf32>, vector<128x128xf32>, vector<1x128xf32> -> vector<1x128xf32>
    %c2 = arith.constant 2 : index
    %c0_20 = arith.constant 0 : index
    %29 = vector.load %arg10[%c2, %c0_20] : memref<8x128xf32, #tpu.memory_space<vmem>>, vector<1x128xf32>
    tpu.vector_store %arg10[%c2, %c0_20], %28 {strides = array<i32>} : memref<8x128xf32, #tpu.memory_space<vmem>>, vector<1x128xf32>,
    %30 = vector.extract_strided_slice %9 {offsets = [3, 0], sizes = [1, 128], strides = [1, 1]} : vector<8x128xf32> to vector<1x128xf32>
    %31 = vector.broadcast %30 : vector<1x128xf32> to vector<128x128xf32>
    %32 = arith.addf %31, %11 : vector<128x128xf32>
    %33 = math.tanh %32 : vector<128x128xf32>
    %cst_21 = arith.constant dense<0.000000e+00> : vector<1x128xf32>
    %34 = tpu.matmul %4, %33, %cst_21 {dimension_numbers = #tpu.dot_dimension_numbers<[1], [1], [0], [0], [0, 0, 1, 0], [], []>} : vector<1x128xf32>, vector<128x128xf32>, vector<1x128xf32> -> vector<1x128xf32>
    %c3 = arith.constant 3 : index
    %c0_22 = arith.constant 0 : index
    %35 = vector.load %arg10[%c3, %c0_22] : memref<8x128xf32, #tpu.memory_space<vmem>>, vector<1x128xf32>
    tpu.vector_store %arg10[%c3, %c0_22], %34 {strides = array<i32>} : memref<8x128xf32, #tpu.memory_space<vmem>>, vector<1x128xf32>,
    %36 = vector.extract_strided_slice %9 {offsets = [4, 0], sizes = [1, 128], strides = [1, 1]} : vector<8x128xf32> to vector<1x128xf32>
    %37 = vector.broadcast %36 : vector<1x128xf32> to vector<128x128xf32>
    %38 = arith.addf %37, %11 : vector<128x128xf32>
    %39 = math.tanh %38 : vector<128x128xf32>
    %cst_23 = arith.constant dense<0.000000e+00> : vector<1x128xf32>
    %40 = tpu.matmul %4, %39, %cst_23 {dimension_numbers = #tpu.dot_dimension_numbers<[1], [1], [0], [0], [0, 0, 1, 0], [], []>} : vector<1x128xf32>, vector<128x128xf32>, vector<1x128xf32> -> vector<1x128xf32>
    %c4 = arith.constant 4 : index
    %c0_24 = arith.constant 0 : index
    %41 = vector.load %arg10[%c4, %c0_24] : memref<8x128xf32, #tpu.memory_space<vmem>>, vector<1x128xf32>
    tpu.vector_store %arg10[%c4, %c0_24], %40 {strides = array<i32>} : memref<8x128xf32, #tpu.memory_space<vmem>>, vector<1x128xf32>,
    %42 = vector.extract_strided_slice %9 {offsets = [5, 0], sizes = [1, 128], strides = [1, 1]} : vector<8x128xf32> to vector<1x128xf32>
    %43 = vector.broadcast %42 : vector<1x128xf32> to vector<128x128xf32>
    %44 = arith.addf %43, %11 : vector<128x128xf32>
    %45 = math.tanh %44 : vector<128x128xf32>
    %cst_25 = arith.constant dense<0.000000e+00> : vector<1x128xf32>
    %46 = tpu.matmul %4, %45, %cst_25 {dimension_numbers = #tpu.dot_dimension_numbers<[1], [1], [0], [0], [0, 0, 1, 0], [], []>} : vector<1x128xf32>, vector<128x128xf32>, vector<1x128xf32> -> vector<1x128xf32>
    %c5 = arith.constant 5 : index
    %c0_26 = arith.constant 0 : index
    %47 = vector.load %arg10[%c5, %c0_26] : memref<8x128xf32, #tpu.memory_space<vmem>>, vector<1x128xf32>
    tpu.vector_store %arg10[%c5, %c0_26], %46 {strides = array<i32>} : memref<8x128xf32, #tpu.memory_space<vmem>>, vector<1x128xf32>,
    %48 = vector.extract_strided_slice %9 {offsets = [6, 0], sizes = [1, 128], strides = [1, 1]} : vector<8x128xf32> to vector<1x128xf32>
    %49 = vector.broadcast %48 : vector<1x128xf32> to vector<128x128xf32>
    %50 = arith.addf %49, %11 : vector<128x128xf32>
    %51 = math.tanh %50 : vector<128x128xf32>
    %cst_27 = arith.constant dense<0.000000e+00> : vector<1x128xf32>
    %52 = tpu.matmul %4, %51, %cst_27 {dimension_numbers = #tpu.dot_dimension_numbers<[1], [1], [0], [0], [0, 0, 1, 0], [], []>} : vector<1x128xf32>, vector<128x128xf32>, vector<1x128xf32> -> vector<1x128xf32>
    %c6 = arith.constant 6 : index
    %c0_28 = arith.constant 0 : index
    %53 = vector.load %arg10[%c6, %c0_28] : memref<8x128xf32, #tpu.memory_space<vmem>>, vector<1x128xf32>
    tpu.vector_store %arg10[%c6, %c0_28], %52 {strides = array<i32>} : memref<8x128xf32, #tpu.memory_space<vmem>>, vector<1x128xf32>,
    %54 = vector.extract_strided_slice %9 {offsets = [7, 0], sizes = [1, 128], strides = [1, 1]} : vector<8x128xf32> to vector<1x128xf32>
    %55 = vector.broadcast %54 : vector<1x128xf32> to vector<128x128xf32>
    %56 = arith.addf %55, %11 : vector<128x128xf32>
    %57 = math.tanh %56 : vector<128x128xf32>
    %cst_29 = arith.constant dense<0.000000e+00> : vector<1x128xf32>
    %58 = tpu.matmul %4, %57, %cst_29 {dimension_numbers = #tpu.dot_dimension_numbers<[1], [1], [0], [0], [0, 0, 1, 0], [], []>} : vector<1x128xf32>, vector<128x128xf32>, vector<1x128xf32> -> vector<1x128xf32>
    %c7 = arith.constant 7 : index
    %c0_30 = arith.constant 0 : index
    %59 = vector.load %arg10[%c7, %c0_30] : memref<8x128xf32, #tpu.memory_space<vmem>>, vector<1x128xf32>
    tpu.vector_store %arg10[%c7, %c0_30], %58 {strides = array<i32>} : memref<8x128xf32, #tpu.memory_space<vmem>>, vector<1x128xf32>,
    %c0_31 = arith.constant 0 : index
    %c0_32 = arith.constant 0 : index
    %60 = vector.load %arg10[%c0_31, %c0_32] : memref<8x128xf32, #tpu.memory_space<vmem>>, vector<8x128xf32>
    %cst_33 = arith.constant dense<0xFF800000> : vector<8xf32>
    %61 = vector.multi_reduction <maximumf>, %60, %cst_33 [1] : vector<8x128xf32> to vector<8xf32>
    %62 = vector.shape_cast %61 : vector<8xf32> to vector<8x1xf32>
    %63 = vector.broadcast %62 : vector<8x1xf32> to vector<8x128xf32>
    %64 = arith.subf %60, %63 : vector<8x128xf32>
    %65 = math.exp %64 : vector<8x128xf32>
    %cst_34 = arith.constant dense<0.000000e+00> : vector<8xf32>
    %66 = vector.multi_reduction <add>, %65, %cst_34 [1] : vector<8x128xf32> to vector<8xf32>
    %67 = vector.shape_cast %66 : vector<8xf32> to vector<8x1xf32>
    %68 = tpu.reciprocal %67 {approx = true} : vector<8x1xf32> -> vector<8x1xf32>
    %69 = vector.broadcast %68 : vector<8x1xf32> to vector<8x128xf32>
    %70 = arith.mulf %65, %69 : vector<8x128xf32>
    %c0_35 = arith.constant 0 : index
    %c0_36 = arith.constant 0 : index
    %c0_37 = arith.constant 0 : index
    %71 = vector.load %arg9[%c0_35, %c0_36, %c0_37] : memref<1x8x128xf32, #tpu.memory_space<vmem>>, vector<1x8x128xf32>
    %72 = vector.shape_cast %71 : vector<1x8x128xf32> to vector<8x128xf32>
    %73 = vector.shape_cast %70 : vector<8x128xf32> to vector<1x8x128xf32>
    tpu.vector_store %arg9[%c0_35, %c0_36, %c0_37], %73 {strides = array<i32>} : memref<1x8x128xf32, #tpu.memory_space<vmem>>, vector<1x8x128xf32>,
    %cst_38 = arith.constant dense<0.000000e+00> : vector<8x128xf32>
    %74 = tpu.matmul %70, %3, %cst_38 {dimension_numbers = #tpu.dot_dimension_numbers<[1], [0], [0], [1], [0, 0, 1, 1], [], []>} : vector<8x128xf32>, vector<128x128xf32>, vector<8x128xf32> -> vector<8x128xf32>
    %c0_39 = arith.constant 0 : index
    %c0_40 = arith.constant 0 : index
    %c0_41 = arith.constant 0 : index
    %75 = vector.load %arg8[%c0_39, %c0_40, %c0_41] : memref<1x8x128xf32, #tpu.memory_space<vmem>>, vector<1x8x128xf32>
    %76 = vector.shape_cast %75 : vector<1x8x128xf32> to vector<8x128xf32>
    %77 = vector.shape_cast %74 : vector<8x128xf32> to vector<1x8x128xf32>
    tpu.vector_store %arg8[%c0_39, %c0_40, %c0_41], %77 {strides = array<i32>} : memref<1x8x128xf32, #tpu.memory_space<vmem>>, vector<1x8x128xf32>,
    return
  }
  func.func @transform_0(%arg0: i32, %arg1: i32) -> (i32, i32, i32) {
    %c0_i32 = arith.constant 0 : i32
    %c0_i32_0 = arith.constant 0 : i32
    return %arg0, %arg1, %c0_i32 : i32, i32, i32
  }
  func.func @transform_1(%arg0: i32, %arg1: i32) -> (i32, i32, i32) {
    %c0_i32 = arith.constant 0 : i32
    %c0_i32_0 = arith.constant 0 : i32
    %c0_i32_1 = arith.constant 0 : i32
    return %arg0, %c0_i32, %c0_i32_0 : i32, i32, i32
  }
  func.func @transform_2(%arg0: i32, %arg1: i32) -> (i32, i32) {
    %c0_i32 = arith.constant 0 : i32
    %c0_i32_0 = arith.constant 0 : i32
    %c0_i32_1 = arith.constant 0 : i32
    return %c0_i32, %c0_i32_0 : i32, i32
  }
  func.func @transform_3(%arg0: i32, %arg1: i32) -> (i32, i32) {
    %c0_i32 = arith.constant 0 : i32
    %c0_i32_0 = arith.constant 0 : i32
    %c0_i32_1 = arith.constant 0 : i32
    return %c0_i32, %c0_i32_0 : i32, i32
  }
  func.func @transform_4(%arg0: i32, %arg1: i32) -> (i32, i32) {
    %c0_i32 = arith.constant 0 : i32
    %c0_i32_0 = arith.constant 0 : i32
    %c0_i32_1 = arith.constant 0 : i32
    return %c0_i32, %c0_i32_0 : i32, i32
  }
  func.func @transform_5(%arg0: i32, %arg1: i32) -> (i32, i32) {
    %c0_i32 = arith.constant 0 : i32
    %c0_i32_0 = arith.constant 0 : i32
    %c0_i32_1 = arith.constant 0 : i32
    return %c0_i32, %c0_i32_0 : i32, i32
  }
  func.func @transform_6(%arg0: i32, %arg1: i32) -> (i32, i32, i32) {
    %c0_i32 = arith.constant 0 : i32
    %c0_i32_0 = arith.constant 0 : i32
    return %arg0, %arg1, %c0_i32 : i32, i32, i32
  }
  func.func @transform_7(%arg0: i32, %arg1: i32) -> (i32, i32, i32) {
    %c0_i32 = arith.constant 0 : i32
    %c0_i32_0 = arith.constant 0 : i32
    return %arg0, %arg1, %c0_i32 : i32, i32, i32
  }
}

</mosaic_0001>

<llo_original>
// kernel: tpu_custom_call.1
$region0: #{tpu_custom_call.1}
  #allocation0 [shape = 'u32[]', space=smem, size = 0x4, offset = 0x4, fixed_abs, tag = 'smem constant byte address 0x4 - core index']
  #allocation1 [shape = 'u32[72,128]{1,0:T(1,128)}', space=vmem, size = 0x9000, scoped, tag = 'internal scratch']
  #allocation2 [shape = 'f32[8,128]{1,0:T(8,128)}', space=vmem, size = 0x1000, scoped, tag = 'scratch operand']
  %s0 = inlined_call_operand.hbm [shape: f32[2,8,128], index: 0, kind: input, shape index: {}]
  %s1 = inlined_call_operand.hbm [shape: f32[2,128,128], index: 1, kind: input, shape index: {}]
  %s2 = inlined_call_operand.hbm [shape: f32[128,128], index: 2, kind: input, shape index: {}]
  %s3 = inlined_call_operand.vmem [shape: f32[1,128], index: 3, kind: input, shape index: {}]
  %s4 = inlined_call_operand.hbm [shape: f32[128,128], index: 4, kind: input, shape index: {}]
  %s5 = inlined_call_operand.vmem [shape: f32[1,128], index: 5, kind: input, shape index: {}]
  %s6 = inlined_call_operand.hbm [shape: f32[2,8,128], index: 6, kind: output, shape index: {0}]
  %s7 = inlined_call_operand.hbm [shape: f32[2,8,128], index: 7, kind: output, shape index: {1}]
  %8 = xla_tuple %s6, %s7
  %s9 = sld [smem:[#allocation0]]
  $region81: #{tpu_custom_call.1} parent=0
    _
  %s11 = ssub.s32 1, %s9
  %s12 = scalar_select 0, %s11, %s9
  $region1: #{tpu_custom_call.1} parent=0
    #allocation3 [shape = 'u8[8192]{0}', space=vmem, size = 0x2000, scoped, tag = 'input window, operand 0']
    #allocation4 [shape = 's32[2]{0}', space=sflag, size = 0x8, scoped, tag = 'scoped memory for tpu_custom_call.1']
    #allocation5 [shape = 's32[2]{0}', space=sflag, size = 0x8, scoped, tag = 'scoped memory for tpu_custom_call.1']
    #allocation6 [shape = 'u8[131072]{0}', space=vmem, size = 0x20000, scoped, tag = 'input window, operand 1']
    #allocation7 [shape = 's32[2]{0}', space=sflag, size = 0x8, scoped, tag = 'scoped memory for tpu_custom_call.1']
    #allocation8 [shape = 'u8[65536]{0}', space=vmem, size = 0x10000, scoped, tag = 'input window, operand 2, single buffered']
    #allocation9 [shape = 'u8[65536]{0}', space=vmem, size = 0x10000, scoped, tag = 'input window, operand 4, single buffered']
    #allocation10 [shape = 's32[1]{0}', space=sflag, size = 0x4, scoped, tag = 'scoped memory for tpu_custom_call.1']
    #allocation11 [shape = 'u8[8192]{0}', space=vmem, size = 0x2000, scoped, tag = 'output window, operand 0']
    #allocation12 [shape = 'u8[8192]{0}', space=vmem, size = 0x2000, scoped, tag = 'output window, operand 1']
    #allocation13 [shape = 's32[2]{0}', space=sflag, size = 0x8, scoped, tag = 'scoped memory for tpu_custom_call.1']
    %13 = vsyncpa [#allocation4], 0
    %s14 = scalar_lea.sflag [#allocation4], 1
    %15 = vsyncpa %s14, 0
    %16 = vsyncpa [#allocation7], 0
    %s17 = scalar_lea.sflag [#allocation7], 1
    %18 = vsyncpa %s17, 0
    %19 = vsyncpa [#allocation10], 0
    %20 = vsyncpa [#allocation5], 0
    %s21 = scalar_lea.sflag [#allocation5], 1
    %22 = vsyncpa %s21, 0
    %23 = vsyncpa [#allocation13], 0
    %s24 = scalar_lea.sflag [#allocation13], 1
    %25 = vsyncpa %s24, 0
    loop: start=0, step=1, limit=4
    $region2: #{tpu_custom_call.1} parent=1 // loop_pre_header
      _
    $region3: #{tpu_custom_call.1} parent=1 // loop_header
      %s27 = sphi 0, %s31
      %p28 = scmp.ge.s32.totalorder %s27, 4
      %s34 = sphi 0, %s46
      %s35 = sphi 0, %s42
      %s36 = sphi 0, %s34
      %s37 = sphi 0, %s35
      %s38 = sphi 0, %s36
      %s39 = sphi 0, %s37
      %s51 = sphi 0, %s53
      %s54 = sphi 0, %s51
      %s55 = sphi 0, %s54
      %s71 = sphi 0, %s55
      %s77 = sphi 0, %s79
      %s80 = sphi 0, %s77
      %s81 = sphi 0, %s80
      %s97 = sphi 0, %s81
      %s101 = sphi 0, %s101
      %s103 = sphi 0, %s101
      %s104 = sphi 0, %s103
      %s118 = sphi 0, %s104
      %s122 = sphi 0, %s122
      %s124 = sphi 0, %s122
      %s125 = sphi 0, %s124
      %s139 = sphi 0, %s125
      %s143 = sphi 0, %s143
      %s145 = sphi 0, %s143
      %s146 = sphi 0, %s145
      %s160 = sphi 0, %s146
      %s164 = sphi 0, %s164
      %s166 = sphi 0, %s164
      %s167 = sphi 0, %s166
      %s181 = sphi 0, %s167
      %s189 = sphi 0, %s191
      %s192 = sphi 0, %s189
      %s193 = sphi 0, %s192
      %s209 = sphi 0, %s193
      %s217 = sphi 0, %s219
      %s220 = sphi 0, %s217
      %s221 = sphi 0, %s220
      %s237 = sphi 0, %s221
    $region4: #{tpu_custom_call.1} parent=1 // loop_header_branch
      %30 = sbr.rel (%p28) target = $region8
    $region5: #{tpu_custom_call.1} parent=1 // loop_body
      %s32 = ssub.s32 %s27, 1
      %s33 = ssub.s32 %s27, 2
      %s40 = sadd.s32 1, %s35
      %p41 = scmp.ge.s32.totalorder %s40, 1
      %s42 = scalar_select %p41, 0, %s40
      %s43 = sadd.s32 1, %s34
      %s44 = scalar_select %p41, %s43, %s34
      %p45 = scmp.ge.s32.totalorder %s44, 2
      %s46 = scalar_select %p45, 0, %s44
      %s47 = ssub.s32 %s34, %s46
      %s48 = ssub.s32 %s35, %s42
      %s49 = sor.u32 %s47, %s48
      %p50 = scmp.eq.s32.totalorder %s49, 0
      %s52 = sadd.s32 %s51, 1
      %s53 = scalar_select %p50, %s51, %s52
      %p56 = pneg %p50
      %p57 = scmp.eq.s32.totalorder %s27, 1
      %p58 = por %p56, %p57
      %p59 = scmp.ne.s32.totalorder %s51, %s54
      %p60 = scmp.eq.s32.totalorder %s27, 0
      %p61 = por %p59, %p60
      %p62 = scmp.ne.s32.totalorder %s51, %s54
      %p63 = scmp.eq.s32.totalorder %s32, 1
      %p64 = por %p62, %p63
      %p65 = scmp.ne.s32.totalorder %s54, %s55
      %p66 = scmp.eq.s32.totalorder %s32, 0
      %p67 = por %p65, %p66
      %p68 = scmp.ne.s32.totalorder %s54, %s55
      %p69 = scmp.eq.s32.totalorder %s33, 1
      %p70 = por %p68, %p69
      %p72 = scmp.ne.s32.totalorder %s55, %s71
      %p73 = scmp.eq.s32.totalorder %s33, 0
      %p74 = por %p72, %p73
      %s75 = ssub.s32 %s34, %s46
      %p76 = scmp.eq.s32.totalorder %s75, 0
      %s78 = sadd.s32 %s77, 1
      %s79 = scalar_select %p76, %s77, %s78
      %p82 = pneg %p76
      %p83 = scmp.eq.s32.totalorder %s27, 1
      %p84 = por %p82, %p83
      %p85 = scmp.ne.s32.totalorder %s77, %s80
      %p86 = scmp.eq.s32.totalorder %s27, 0
      %p87 = por %p85, %p86
      %p88 = scmp.ne.s32.totalorder %s77, %s80
      %p89 = scmp.eq.s32.totalorder %s32, 1
      %p90 = por %p88, %p89
      %p91 = scmp.ne.s32.totalorder %s80, %s81
      %p92 = scmp.eq.s32.totalorder %s32, 0
      %p93 = por %p91, %p92
      %p94 = scmp.ne.s32.totalorder %s80, %s81
      %p95 = scmp.eq.s32.totalorder %s33, 1
      %p96 = por %p94, %p95
      %p98 = scmp.ne.s32.totalorder %s81, %s97
      %p99 = scmp.eq.s32.totalorder %s33, 0
      %p100 = por %p98, %p99
      %s102 = sadd.s32 %s101, 1
      %p105 = scmp.eq.s32.totalorder %s27, 1
      %p106 = scmp.ne.s32.totalorder %s101, %s103
      %p107 = scmp.eq.s32.totalorder %s27, 0
      %p108 = por %p106, %p107
      %p109 = scmp.ne.s32.totalorder %s101, %s103
      %p110 = scmp.eq.s32.totalorder %s32, 1
      %p111 = por %p109, %p110
      %p112 = scmp.ne.s32.totalorder %s103, %s104
      %p113 = scmp.eq.s32.totalorder %s32, 0
      %p114 = por %p112, %p113
      %p115 = scmp.ne.s32.totalorder %s103, %s104
      %p116 = scmp.eq.s32.totalorder %s33, 1
      %p117 = por %p115, %p116
      %p119 = scmp.ne.s32.totalorder %s104, %s118
      %p120 = scmp.eq.s32.totalorder %s33, 0
      %p121 = por %p119, %p120
      %s123 = sadd.s32 %s122, 1
      %p126 = scmp.eq.s32.totalorder %s27, 1
      %p127 = scmp.ne.s32.totalorder %s122, %s124
      %p128 = scmp.eq.s32.totalorder %s27, 0
      %p129 = por %p127, %p128
      %p130 = scmp.ne.s32.totalorder %s122, %s124
      %p131 = scmp.eq.s32.totalorder %s32, 1
      %p132 = por %p130, %p131
      %p133 = scmp.ne.s32.totalorder %s124, %s125
      %p134 = scmp.eq.s32.totalorder %s32, 0
      %p135 = por %p133, %p134
      %p136 = scmp.ne.s32.totalorder %s124, %s125
      %p137 = scmp.eq.s32.totalorder %s33, 1
      %p138 = por %p136, %p137
      %p140 = scmp.ne.s32.totalorder %s125, %s139
      %p141 = scmp.eq.s32.totalorder %s33, 0
      %p142 = por %p140, %p141
      %s144 = sadd.s32 %s143, 1
      %p147 = scmp.eq.s32.totalorder %s27, 1
      %p148 = scmp.ne.s32.totalorder %s143, %s145
      %p149 = scmp.eq.s32.totalorder %s27, 0
      %p150 = por %p148, %p149
      %p151 = scmp.ne.s32.totalorder %s143, %s145
      %p152 = scmp.eq.s32.totalorder %s32, 1
      %p153 = por %p151, %p152
      %p154 = scmp.ne.s32.totalorder %s145, %s146
      %p155 = scmp.eq.s32.totalorder %s32, 0
      %p156 = por %p154, %p155
      %p157 = scmp.ne.s32.totalorder %s145, %s146
      %p158 = scmp.eq.s32.totalorder %s33, 1
      %p159 = por %p157, %p158
      %p161 = scmp.ne.s32.totalorder %s146, %s160
      %p162 = scmp.eq.s32.totalorder %s33, 0
      %p163 = por %p161, %p162
      %s165 = sadd.s32 %s164, 1
      %p168 = scmp.eq.s32.totalorder %s27, 1
      %p169 = scmp.ne.s32.totalorder %s164, %s166
      %p170 = scmp.eq.s32.totalorder %s27, 0
      %p171 = por %p169, %p170
      %p172 = scmp.ne.s32.totalorder %s164, %s166
      %p173 = scmp.eq.s32.totalorder %s32, 1
      %p174 = por %p172, %p173
      %p175 = scmp.ne.s32.totalorder %s166, %s167
      %p176 = scmp.eq.s32.totalorder %s32, 0
      %p177 = por %p175, %p176
      %p178 = scmp.ne.s32.totalorder %s166, %s167
      %p179 = scmp.eq.s32.totalorder %s33, 1
      %p180 = por %p178, %p179
      %p182 = scmp.ne.s32.totalorder %s167, %s181
      %p183 = scmp.eq.s32.totalorder %s33, 0
      %p184 = por %p182, %p183
      %s185 = ssub.s32 %s34, %s46
      %s186 = ssub.s32 %s35, %s42
      %s187 = sor.u32 %s185, %s186
      %p188 = scmp.eq.s32.totalorder %s187, 0
      %s190 = sadd.s32 %s189, 1
      %s191 = scalar_select %p188, %s189, %s190
      %p194 = pneg %p188
      %p195 = scmp.eq.s32.totalorder %s27, 1
      %p196 = por %p194, %p195
      %p197 = scmp.ne.s32.totalorder %s189, %s192
      %p198 = scmp.eq.s32.totalorder %s27, 0
      %p199 = por %p197, %p198
      %p200 = scmp.ne.s32.totalorder %s189, %s192
      %p201 = scmp.eq.s32.totalorder %s32, 1
      %p202 = por %p200, %p201
      %p203 = scmp.ne.s32.totalorder %s192, %s193
      %p204 = scmp.eq.s32.totalorder %s32, 0
      %p205 = por %p203, %p204
      %p206 = scmp.ne.s32.totalorder %s192, %s193
      %p207 = scmp.eq.s32.totalorder %s33, 1
      %p208 = por %p206, %p207
      %p210 = scmp.ne.s32.totalorder %s193, %s209
      %p211 = scmp.eq.s32.totalorder %s33, 0
      %p212 = por %p210, %p211
      %s213 = ssub.s32 %s34, %s46
      %s214 = ssub.s32 %s35, %s42
      %s215 = sor.u32 %s213, %s214
      %p216 = scmp.eq.s32.totalorder %s215, 0
      %s218 = sadd.s32 %s217, 1
      %s219 = scalar_select %p216, %s217, %s218
      %p222 = pneg %p216
      %p223 = scmp.eq.s32.totalorder %s27, 1
      %p224 = por %p222, %p223
      %p225 = scmp.ne.s32.totalorder %s217, %s220
      %p226 = scmp.eq.s32.totalorder %s27, 0
      %p227 = por %p225, %p226
      %p228 = scmp.ne.s32.totalorder %s217, %s220
      %p229 = scmp.eq.s32.totalorder %s32, 1
      %p230 = por %p228, %p229
      %p231 = scmp.ne.s32.totalorder %s220, %s221
      %p232 = scmp.eq.s32.totalorder %s32, 0
      %p233 = por %p231, %p232
      %p234 = scmp.ne.s32.totalorder %s220, %s221
      %p235 = scmp.eq.s32.totalorder %s33, 1
      %p236 = por %p234, %p235
      %p238 = scmp.ne.s32.totalorder %s221, %s237
      %p239 = scmp.eq.s32.totalorder %s33, 0
      %p240 = por %p238, %p239
      %p241 = scmp.le.s32.totalorder 1, %s27
      %p242 = scmp.lt.s32.totalorder %s27, 3
      %p243 = pnand %p241, %p242
      %p244 = pneg %p243
      // Predicated region
      $region9: #{tpu_custom_call.1} parent=5 // pred_check
        _
      $region10: #{tpu_custom_call.1} parent=5 // pred_check_branch
        %246 = sbr.rel (%p243) target = $region12
      $region11: #{tpu_custom_call.1} parent=5 // pred_region
        %s247 = ssub.s32 %s27, 1
        // Predicated region
        $region13: #{tpu_custom_call.1} parent=11 // pred_check
          %p248 = pneg %p114
        $region14: #{tpu_custom_call.1} parent=11 // pred_check_branch
          %250 = sbr.rel (%p248) target = $region16
        $region15: #{tpu_custom_call.1} parent=11 // pred_region
          %252 = vsyncadd [#allocation7], 0
          %s253 = sshll.u32 %s2, 4
          %s254 = int_to_ptr.hbm [resolvable:$true] %s253
          %s255 = sshll.u32 [#allocation8], 4
          %s256 = int_to_ptr.vmem [resolvable:$true] %s255
          %261 = dma.hbm_to_vmem [thread:$0]  %s254, 2048, %s256, [#allocation7], 128, 128, 8
        $region16: #{tpu_custom_call.1} parent=11 // pred_fallthru
          _
        // Predicated region
        $region17: #{tpu_custom_call.1} parent=11 // pred_check
          %p262 = pneg %p135
        $region18: #{tpu_custom_call.1} parent=11 // pred_check_branch
          %264 = sbr.rel (%p262) target = $region20
        $region19: #{tpu_custom_call.1} parent=11 // pred_region
          _
        $region20: #{tpu_custom_call.1} parent=11 // pred_fallthru
          _
        // Predicated region
        $region21: #{tpu_custom_call.1} parent=11 // pred_check
          %p265 = pneg %p156
        $region22: #{tpu_custom_call.1} parent=11 // pred_check_branch
          %267 = sbr.rel (%p265) target = $region24
        $region23: #{tpu_custom_call.1} parent=11 // pred_region
          %269 = vsyncadd [#allocation10], 0
          %s270 = sshll.u32 %s4, 4
          %s271 = int_to_ptr.hbm [resolvable:$true] %s270
          %s272 = sshll.u32 [#allocation9], 4
          %s273 = int_to_ptr.vmem [resolvable:$true] %s272
          %278 = dma.hbm_to_vmem [thread:$0]  %s271, 2048, %s273, [#allocation10], 128, 128, 8
        $region24: #{tpu_custom_call.1} parent=11 // pred_fallthru
          _
        // Predicated region
        $region25: #{tpu_custom_call.1} parent=11 // pred_check
          %p279 = pneg %p177
        $region26: #{tpu_custom_call.1} parent=11 // pred_check_branch
          %281 = sbr.rel (%p279) target = $region28
        $region27: #{tpu_custom_call.1} parent=11 // pred_region
          _
        $region28: #{tpu_custom_call.1} parent=11 // pred_fallthru
          _
      $region12: #{tpu_custom_call.1} parent=5 // pred_fallthru
        _
      %p282 = scmp.lt.s32.totalorder %s27, 2
      // Predicated region
      $region29: #{tpu_custom_call.1} parent=5 // pred_check
        %p283 = pneg %p282
      $region30: #{tpu_custom_call.1} parent=5 // pred_check_branch
        %285 = sbr.rel (%p283) target = $region32
      $region31: #{tpu_custom_call.1} parent=5 // pred_region
        // Predicated region
        $region33: #{tpu_custom_call.1} parent=31 // pred_check
          %p286 = pneg %p61
        $region34: #{tpu_custom_call.1} parent=31 // pred_check_branch
          %288 = sbr.rel (%p286) target = $region36
        $region35: #{tpu_custom_call.1} parent=31 // pred_region
          %s289 = sand.u32 %s51, 1
          %s290 = scalar_lea.sflag [#allocation4], %s289
          %s291 = sand.u32 %s51, 1
          %s292 = smul.addr %s291, 8
          %s293 = scalar_lea.vmem [#allocation3], %s292
          %295 = vsyncadd %s290, 0
          %s296 = sadd.s32 %s35, %s34
          %s297 = smul.addr %s296, 8
          %s298 = scalar_lea.hbm %s0, %s297
          %s300 = sshll.u32 %s298, 4
          %s301 = int_to_ptr.hbm [resolvable:$true] %s300
          %s302 = sshll.u32 %s293, 4
          %s303 = int_to_ptr.vmem [resolvable:$true] %s302
          %305 = dma.hbm_to_vmem [thread:$0]  %s301, 128, %s303, %s290
        $region36: #{tpu_custom_call.1} parent=31 // pred_fallthru
          _
        // Predicated region
        $region37: #{tpu_custom_call.1} parent=31 // pred_check
          %p306 = pneg %p87
        $region38: #{tpu_custom_call.1} parent=31 // pred_check_branch
          %308 = sbr.rel (%p306) target = $region40
        $region39: #{tpu_custom_call.1} parent=31 // pred_region
          %s309 = sand.u32 %s27, 1
          %s310 = scalar_lea.sflag [#allocation7], %s309
          %s311 = sand.u32 %s77, 1
          %s312 = smul.addr %s311, 128
          %s313 = scalar_lea.vmem [#allocation6], %s312
          %315 = vsyncadd %s310, 0
          %s316 = smul.addr %s34, 16
          %s317 = smul.addr %s316, 8
          %s318 = scalar_lea.hbm %s1, %s317
          %s319 = sshll.u32 %s318, 4
          %s320 = int_to_ptr.hbm [resolvable:$true] %s319
          %s321 = sshll.u32 %s313, 4
          %s322 = int_to_ptr.vmem [resolvable:$true] %s321
          %327 = dma.hbm_to_vmem [thread:$0]  %s320, 2048, %s322, %s310, 128, 128, 8
        $region40: #{tpu_custom_call.1} parent=31 // pred_fallthru
          _
      $region32: #{tpu_custom_call.1} parent=5 // pred_fallthru
        _
      %p328 = scmp.le.s32.totalorder 1, %s27
      %p329 = scmp.lt.s32.totalorder %s27, 3
      %p330 = pnand %p328, %p329
      %p331 = pneg %p330
      // Predicated region
      $region41: #{tpu_custom_call.1} parent=5 // pred_check
        _
      $region42: #{tpu_custom_call.1} parent=5 // pred_check_branch
        %333 = sbr.rel (%p330) target = $region44
      $region43: #{tpu_custom_call.1} parent=5 // pred_region
        %s334 = ssub.s32 %s27, 1
        %s335 = sand.u32 %s54, 1
        %s336 = scalar_lea.sflag [#allocation4], %s335
        %s337 = sand.u32 %s54, 1
        %s338 = smul.addr %s337, 8
        %s339 = scalar_lea.vmem [#allocation3], %s338
        // Predicated region
        $region45: #{tpu_custom_call.1} parent=43 // pred_check
          %p340 = pneg %p67
        $region46: #{tpu_custom_call.1} parent=43 // pred_check_branch
          %342 = sbr.rel (%p340) target = $region48
        $region47: #{tpu_custom_call.1} parent=43 // pred_region
          %344 = dma.done %s336, 128
        $region48: #{tpu_custom_call.1} parent=43 // pred_fallthru
          _
        %s345 = sand.u32 %s32, 1
        %s346 = scalar_lea.sflag [#allocation7], %s345
        %s347 = sand.u32 %s80, 1
        %s348 = smul.addr %s347, 128
        %s349 = scalar_lea.vmem [#allocation6], %s348
        // Predicated region
        $region49: #{tpu_custom_call.1} parent=43 // pred_check
          %p350 = pneg %p93
        $region50: #{tpu_custom_call.1} parent=43 // pred_check_branch
          %352 = sbr.rel (%p350) target = $region52
        $region51: #{tpu_custom_call.1} parent=43 // pred_region
          %354 = dma.done %s346, 2048
        $region52: #{tpu_custom_call.1} parent=43 // pred_fallthru
          _
        // Predicated region
        $region53: #{tpu_custom_call.1} parent=43 // pred_check
          %p355 = pneg %p114
        $region54: #{tpu_custom_call.1} parent=43 // pred_check_branch
          %357 = sbr.rel (%p355) target = $region56
        $region55: #{tpu_custom_call.1} parent=43 // pred_region
          %359 = dma.done [#allocation7], 2048
        $region56: #{tpu_custom_call.1} parent=43 // pred_fallthru
          _
        // Predicated region
        $region57: #{tpu_custom_call.1} parent=43 // pred_check
          %p360 = pneg %p156
        $region58: #{tpu_custom_call.1} parent=43 // pred_check_branch
          %362 = sbr.rel (%p360) target = $region60
        $region59: #{tpu_custom_call.1} parent=43 // pred_region
          %364 = dma.done [#allocation10], 2048
        $region60: #{tpu_custom_call.1} parent=43 // pred_fallthru
          _
        %s365 = sand.u32 %s54, 1
        %s366 = scalar_lea.sflag [#allocation4], %s365
        %s367 = sand.u32 %s54, 1
        %s368 = smul.addr %s367, 8
        %s369 = scalar_lea.vmem [#allocation3], %s368
        %p370 = pneg %p67
        %p371 = pneg %p64
        %s372 = sand.u32 %s32, 1
        %s373 = scalar_lea.sflag [#allocation7], %s372
        %s374 = sand.u32 %s80, 1
        %s375 = smul.addr %s374, 128
        %s376 = scalar_lea.vmem [#allocation6], %s375
        %p377 = pneg %p93
        %p378 = pneg %p90
        %p379 = pneg %p114
        %p380 = pneg %p111
        %p381 = pneg %p135
        %p382 = pneg %p132
        %p383 = pneg %p156
        %p384 = pneg %p153
        %p385 = pneg %p177
        %p386 = pneg %p174
        %p387 = pneg %p205
        %p388 = pneg %p202
        %s389 = sand.u32 %s192, 1
        %s390 = scalar_lea.sflag [#allocation5], %s389
        %s391 = sand.u32 %s192, 1
        %s392 = smul.addr %s391, 8
        %s393 = scalar_lea.vmem [#allocation11], %s392
        %p394 = pneg %p233
        %p395 = pneg %p230
        %s396 = sand.u32 %s220, 1
        %s397 = scalar_lea.sflag [#allocation13], %s396
        %s398 = sand.u32 %s220, 1
        %s399 = smul.addr %s398, 8
        %s400 = scalar_lea.vmem [#allocation12], %s399
        %v401 = vld [vmem:[%s339] sm:$0xff]
        %v402 = vld [vmem:[%s349] sm:$0xff]
        %v403 = vld [vmem:[%s349 + $0x8] sm:$0xff]
        %v404 = vld [vmem:[%s349 + $0x10] sm:$0xff]
        %v405 = vld [vmem:[%s349 + $0x18] sm:$0xff]
        %v406 = vld [vmem:[%s349 + $0x20] sm:$0xff]
        %v407 = vld [vmem:[%s349 + $0x28] sm:$0xff]
        %v408 = vld [vmem:[%s349 + $0x30] sm:$0xff]
        %v409 = vld [vmem:[%s349 + $0x38] sm:$0xff]
        %v410 = vld [vmem:[%s349 + $0x40] sm:$0xff]
        %v411 = vld [vmem:[%s349 + $0x48] sm:$0xff]
        %v412 = vld [vmem:[%s349 + $0x50] sm:$0xff]
        %v413 = vld [vmem:[%s349 + $0x58] sm:$0xff]
        %v414 = vld [vmem:[%s349 + $0x60] sm:$0xff]
        %v415 = vld [vmem:[%s349 + $0x68] sm:$0xff]
        %v416 = vld [vmem:[%s349 + $0x70] sm:$0xff]
        %v417 = vld [vmem:[%s349 + $0x78] sm:$0xff]
        %v418 = vld [vmem:[%s5] sm:$0x1]
        %v419 = vld [vmem:[#allocation8] sm:$0xff]
        %v420 = vld [vmem:[#allocation8 + $0x8] sm:$0xff]
        %v421 = vld [vmem:[#allocation8 + $0x10] sm:$0xff]
        %v422 = vld [vmem:[#allocation8 + $0x18] sm:$0xff]
        %v423 = vld [vmem:[#allocation8 + $0x20] sm:$0xff]
        %v424 = vld [vmem:[#allocation8 + $0x28] sm:$0xff]
        %v425 = vld [vmem:[#allocation8 + $0x30] sm:$0xff]
        %v426 = vld [vmem:[#allocation8 + $0x38] sm:$0xff]
        %v427 = vld [vmem:[#allocation8 + $0x40] sm:$0xff]
        %v428 = vld [vmem:[#allocation8 + $0x48] sm:$0xff]
        %v429 = vld [vmem:[#allocation8 + $0x50] sm:$0xff]
        %v430 = vld [vmem:[#allocation8 + $0x58] sm:$0xff]
        %v431 = vld [vmem:[#allocation8 + $0x60] sm:$0xff]
        %v432 = vld [vmem:[#allocation8 + $0x68] sm:$0xff]
        %v433 = vld [vmem:[#allocation8 + $0x70] sm:$0xff]
        %v434 = vld [vmem:[#allocation8 + $0x78] sm:$0xff]
        %v435 = vld [vmem:[%s3] sm:$0x1]
        %v437 = vperm.slane %v435, 0
        %439 = vmatpush.msra.mxu0 %v434
        %440 = vmatpush.msra.mxu0 %v433
        %441 = vmatpush.msra.mxu0 %v432
        %442 = vmatpush.msra.mxu0 %v431
        %443 = vmatpush.msra.mxu0 %v430
        %444 = vmatpush.msra.mxu0 %v429
        %445 = vmatpush.msra.mxu0 %v428
        %446 = vmatpush.msra.mxu0 %v427
        %447 = vmatpush.msra.mxu0 %v426
        %448 = vmatpush.msra.mxu0 %v425
        %449 = vmatpush.msra.mxu0 %v424
        %450 = vmatpush.msra.mxu0 %v423
        %451 = vmatpush.msra.mxu0 %v422
        %452 = vmatpush.msra.mxu0 %v421
        %453 = vmatpush.msra.mxu0 %v420
        %454 = vmatpush.msra.mxu0 %v419
        %455 = vmatmul.f32.gmra.mxu0 %v401
        %v456 = vpop.f32.mrf.mxu0
        %v457 = vadd.f32 %v437, %v456
        %458 = vdwg.mxu0
        %v459 = vld [vmem:[#allocation9] sm:$0xff]
        %v460 = vld [vmem:[#allocation9 + $0x8] sm:$0xff]
        %v461 = vld [vmem:[#allocation9 + $0x10] sm:$0xff]
        %v462 = vld [vmem:[#allocation9 + $0x18] sm:$0xff]
        %v463 = vld [vmem:[#allocation9 + $0x20] sm:$0xff]
        %v464 = vld [vmem:[#allocation9 + $0x28] sm:$0xff]
        %v465 = vld [vmem:[#allocation9 + $0x30] sm:$0xff]
        %v466 = vld [vmem:[#allocation9 + $0x38] sm:$0xff]
        %v467 = vld [vmem:[#allocation9 + $0x40] sm:$0xff]
        %v468 = vld [vmem:[#allocation9 + $0x48] sm:$0xff]
        %v469 = vld [vmem:[#allocation9 + $0x50] sm:$0xff]
        %v470 = vld [vmem:[#allocation9 + $0x58] sm:$0xff]
        %v471 = vld [vmem:[#allocation9 + $0x60] sm:$0xff]
        %v472 = vld [vmem:[#allocation9 + $0x68] sm:$0xff]
        %v473 = vld [vmem:[#allocation9 + $0x70] sm:$0xff]
        %v474 = vld [vmem:[#allocation9 + $0x78] sm:$0xff]
        %475 = vmatpush.msra.mxu0 %v474
        %476 = vmatpush.msra.mxu0 %v473
        %477 = vmatpush.msra.mxu0 %v472
        %478 = vmatpush.msra.mxu0 %v471
        %479 = vmatpush.msra.mxu0 %v470
        %480 = vmatpush.msra.mxu0 %v469
        %481 = vmatpush.msra.mxu0 %v468
        %482 = vmatpush.msra.mxu0 %v467
        %483 = vmatpush.msra.mxu0 %v466
        %484 = vmatpush.msra.mxu0 %v465
        %485 = vmatpush.msra.mxu0 %v464
        %486 = vmatpush.msra.mxu0 %v463
        %487 = vmatpush.msra.mxu0 %v462
        %488 = vmatpush.msra.mxu0 %v461
        %489 = vmatpush.msra.mxu0 %v460
        %490 = vmatpush.msra.mxu0 %v459
        %491 = vmatmul.f32.gmra.mxu0 %v402
        %v492 = vpop.f32.mrf.mxu0
        %v493 = vadd.f32 0.0, %v492
        %494 = vmatmul.f32.gmra.mxu0 %v403
        %v495 = vpop.f32.mrf.mxu0
        %v496 = vadd.f32 0.0, %v495
        %497 = vmatmul.f32.gmra.mxu0 %v404
        %v498 = vpop.f32.mrf.mxu0
        %v499 = vadd.f32 0.0, %v498
        %500 = vmatmul.f32.gmra.mxu0 %v405
        %v501 = vpop.f32.mrf.mxu0
        %v502 = vadd.f32 0.0, %v501
        %503 = vmatmul.f32.gmra.mxu0 %v406
        %v504 = vpop.f32.mrf.mxu0
        %v505 = vadd.f32 0.0, %v504
        %506 = vmatmul.f32.gmra.mxu0 %v407
        %v507 = vpop.f32.mrf.mxu0
        %v508 = vadd.f32 0.0, %v507
        %509 = vmatmul.f32.gmra.mxu0 %v408
        %v510 = vpop.f32.mrf.mxu0
        %v511 = vadd.f32 0.0, %v510
        %512 = vmatmul.f32.gmra.mxu0 %v409
        %v513 = vpop.f32.mrf.mxu0
        %v514 = vadd.f32 0.0, %v513
        %515 = vmatmul.f32.gmra.mxu0 %v410
        %v516 = vpop.f32.mrf.mxu0
        %v517 = vadd.f32 0.0, %v516
        %518 = vmatmul.f32.gmra.mxu0 %v411
        %v519 = vpop.f32.mrf.mxu0
        %v520 = vadd.f32 0.0, %v519
        %521 = vmatmul.f32.gmra.mxu0 %v412
        %v522 = vpop.f32.mrf.mxu0
        %v523 = vadd.f32 0.0, %v522
        %524 = vmatmul.f32.gmra.mxu0 %v413
        %v525 = vpop.f32.mrf.mxu0
        %v526 = vadd.f32 0.0, %v525
        %527 = vmatmul.f32.gmra.mxu0 %v414
        %v528 = vpop.f32.mrf.mxu0
        %v529 = vadd.f32 0.0, %v528
        %530 = vmatmul.f32.gmra.mxu0 %v415
        %v531 = vpop.f32.mrf.mxu0
        %v532 = vadd.f32 0.0, %v531
        %533 = vmatmul.f32.gmra.mxu0 %v416
        %v534 = vpop.f32.mrf.mxu0
        %v535 = vadd.f32 0.0, %v534
        %536 = vmatmul.f32.gmra.mxu0 %v417
        %v537 = vpop.f32.mrf.mxu0
        %v538 = vadd.f32 0.0, %v537
        %539 = vdwg.mxu0
        %v540 = vperm.slane %v457, 0
        %v541 = vadd.f32 %v540, %v493
        %v542 = vadd.f32 %v540, %v496
        %v543 = vadd.f32 %v540, %v499
        %v544 = vadd.f32 %v540, %v502
        %v545 = vadd.f32 %v540, %v505
        %v546 = vadd.f32 %v540, %v508
        %v547 = vadd.f32 %v540, %v511
        %v548 = vadd.f32 %v540, %v514
        %v549 = vadd.f32 %v540, %v517
        %v550 = vadd.f32 %v540, %v520
        %v551 = vadd.f32 %v540, %v523
        %v552 = vadd.f32 %v540, %v526
        %v553 = vadd.f32 %v540, %v529
        %v554 = vadd.f32 %v540, %v532
        %v555 = vadd.f32 %v540, %v535
        %v556 = vadd.f32 %v540, %v538
        %v557 = vtanh.pop %v541
        %v558 = vtanh.pop %v542
        %v559 = vtanh.pop %v543
        %v560 = vtanh.pop %v544
        %v561 = vtanh.pop %v545
        %v562 = vtanh.pop %v546
        %v563 = vtanh.pop %v547
        %v564 = vtanh.pop %v548
        %v565 = vtanh.pop %v549
        %v566 = vtanh.pop %v550
        %v567 = vtanh.pop %v551
        %v568 = vtanh.pop %v552
        %v569 = vtanh.pop %v553
        %v570 = vtanh.pop %v554
        %v571 = vtanh.pop %v555
        %v572 = vtanh.pop %v556
        %573 = vmatpush.xpose.msra.mxu0 %v572
        %574 = vmatpush.xpose.msra.mxu0 %v571
        %575 = vmatpush.xpose.msra.mxu0 %v570
        %576 = vmatpush.xpose.msra.mxu0 %v569
        %577 = vmatpush.xpose.msra.mxu0 %v568
        %578 = vmatpush.xpose.msra.mxu0 %v567
        %579 = vmatpush.xpose.msra.mxu0 %v566
        %580 = vmatpush.xpose.msra.mxu0 %v565
        %581 = vmatpush.xpose.msra.mxu0 %v564
        %582 = vmatpush.xpose.msra.mxu0 %v563
        %583 = vmatpush.xpose.msra.mxu0 %v562
        %584 = vmatpush.xpose.msra.mxu0 %v561
        %585 = vmatpush.xpose.msra.mxu0 %v560
        %586 = vmatpush.xpose.msra.mxu0 %v559
        %587 = vmatpush.xpose.msra.mxu0 %v558
        %588 = vmatpush.xpose.msra.mxu0 %v557
        %589 = vmatmul.f32.gmra.mxu0 %v418
        %v590 = vpop.f32.mrf.mxu0
        %v591 = vadd.f32 0.0, %v590
        %592 = vdwg.mxu0
        %593 = vst [vmem:[#allocation2] sm:$0x1] %v591
        %v594 = vperm.slane %v457, 1
        %v595 = vadd.f32 %v594, %v493
        %v596 = vadd.f32 %v594, %v496
        %v597 = vadd.f32 %v594, %v499
        %v598 = vadd.f32 %v594, %v502
        %v599 = vadd.f32 %v594, %v505
        %v600 = vadd.f32 %v594, %v508
        %v601 = vadd.f32 %v594, %v511
        %v602 = vadd.f32 %v594, %v514
        %v603 = vadd.f32 %v594, %v517
        %v604 = vadd.f32 %v594, %v520
        %v605 = vadd.f32 %v594, %v523
        %v606 = vadd.f32 %v594, %v526
        %v607 = vadd.f32 %v594, %v529
        %v608 = vadd.f32 %v594, %v532
        %v609 = vadd.f32 %v594, %v535
        %v610 = vadd.f32 %v594, %v538
        %v611 = vtanh.pop %v595
        %v612 = vtanh.pop %v596
        %v613 = vtanh.pop %v597
        %v614 = vtanh.pop %v598
        %v615 = vtanh.pop %v599
        %v616 = vtanh.pop %v600
        %v617 = vtanh.pop %v601
        %v618 = vtanh.pop %v602
        %v619 = vtanh.pop %v603
        %v620 = vtanh.pop %v604
        %v621 = vtanh.pop %v605
        %v622 = vtanh.pop %v606
        %v623 = vtanh.pop %v607
        %v624 = vtanh.pop %v608
        %v625 = vtanh.pop %v609
        %v626 = vtanh.pop %v610
        %627 = vmatpush.xpose.msra.mxu0 %v626
        %628 = vmatpush.xpose.msra.mxu0 %v625
        %629 = vmatpush.xpose.msra.mxu0 %v624
        %630 = vmatpush.xpose.msra.mxu0 %v623
        %631 = vmatpush.xpose.msra.mxu0 %v622
        %632 = vmatpush.xpose.msra.mxu0 %v621
        %633 = vmatpush.xpose.msra.mxu0 %v620
        %634 = vmatpush.xpose.msra.mxu0 %v619
        %635 = vmatpush.xpose.msra.mxu0 %v618
        %636 = vmatpush.xpose.msra.mxu0 %v617
        %637 = vmatpush.xpose.msra.mxu0 %v616
        %638 = vmatpush.xpose.msra.mxu0 %v615
        %639 = vmatpush.xpose.msra.mxu0 %v614
        %640 = vmatpush.xpose.msra.mxu0 %v613
        %641 = vmatpush.xpose.msra.mxu0 %v612
        %642 = vmatpush.xpose.msra.mxu0 %v611
        %643 = vmatmul.f32.gmra.mxu0 %v418
        %v644 = vpop.f32.mrf.mxu0
        %v645 = vadd.f32 0.0, %v644
        %646 = vdwg.mxu0
        %647 = vst [vmem:[#allocation2 + $0x1] sm:$0x1] %v645
        %v648 = vperm.slane %v457, 2
        %v649 = vadd.f32 %v648, %v493
        %v650 = vadd.f32 %v648, %v496
        %v651 = vadd.f32 %v648, %v499
        %v652 = vadd.f32 %v648, %v502
        %v653 = vadd.f32 %v648, %v505
        %v654 = vadd.f32 %v648, %v508
        %v655 = vadd.f32 %v648, %v511
        %v656 = vadd.f32 %v648, %v514
        %v657 = vadd.f32 %v648, %v517
        %v658 = vadd.f32 %v648, %v520
        %v659 = vadd.f32 %v648, %v523
        %v660 = vadd.f32 %v648, %v526
        %v661 = vadd.f32 %v648, %v529
        %v662 = vadd.f32 %v648, %v532
        %v663 = vadd.f32 %v648, %v535
        %v664 = vadd.f32 %v648, %v538
        %v665 = vtanh.pop %v649
        %v666 = vtanh.pop %v650
        %v667 = vtanh.pop %v651
        %v668 = vtanh.pop %v652
        %v669 = vtanh.pop %v653
        %v670 = vtanh.pop %v654
        %v671 = vtanh.pop %v655
        %v672 = vtanh.pop %v656
        %v673 = vtanh.pop %v657
        %v674 = vtanh.pop %v658
        %v675 = vtanh.pop %v659
        %v676 = vtanh.pop %v660
        %v677 = vtanh.pop %v661
        %v678 = vtanh.pop %v662
        %v679 = vtanh.pop %v663
        %v680 = vtanh.pop %v664
        %681 = vmatpush.xpose.msra.mxu0 %v680
        %682 = vmatpush.xpose.msra.mxu0 %v679
        %683 = vmatpush.xpose.msra.mxu0 %v678
        %684 = vmatpush.xpose.msra.mxu0 %v677
        %685 = vmatpush.xpose.msra.mxu0 %v676
        %686 = vmatpush.xpose.msra.mxu0 %v675
        %687 = vmatpush.xpose.msra.mxu0 %v674
        %688 = vmatpush.xpose.msra.mxu0 %v673
        %689 = vmatpush.xpose.msra.mxu0 %v672
        %690 = vmatpush.xpose.msra.mxu0 %v671
        %691 = vmatpush.xpose.msra.mxu0 %v670
        %692 = vmatpush.xpose.msra.mxu0 %v669
        %693 = vmatpush.xpose.msra.mxu0 %v668
        %694 = vmatpush.xpose.msra.mxu0 %v667
        %695 = vmatpush.xpose.msra.mxu0 %v666
        %696 = vmatpush.xpose.msra.mxu0 %v665
        %697 = vmatmul.f32.gmra.mxu0 %v418
        %v698 = vpop.f32.mrf.mxu0
        %v699 = vadd.f32 0.0, %v698
        %700 = vdwg.mxu0
        %701 = vst [vmem:[#allocation2 + $0x2] sm:$0x1] %v699
        %v702 = vperm.slane %v457, 3
        %v703 = vadd.f32 %v702, %v493
        %v704 = vadd.f32 %v702, %v496
        %v705 = vadd.f32 %v702, %v499
        %v706 = vadd.f32 %v702, %v502
        %v707 = vadd.f32 %v702, %v505
        %v708 = vadd.f32 %v702, %v508
        %v709 = vadd.f32 %v702, %v511
        %v710 = vadd.f32 %v702, %v514
        %v711 = vadd.f32 %v702, %v517
        %v712 = vadd.f32 %v702, %v520
        %v713 = vadd.f32 %v702, %v523
        %v714 = vadd.f32 %v702, %v526
        %v715 = vadd.f32 %v702, %v529
        %v716 = vadd.f32 %v702, %v532
        %v717 = vadd.f32 %v702, %v535
        %v718 = vadd.f32 %v702, %v538
        %v719 = vtanh.pop %v703
        %v720 = vtanh.pop %v704
        %v721 = vtanh.pop %v705
        %v722 = vtanh.pop %v706
        %v723 = vtanh.pop %v707
        %v724 = vtanh.pop %v708
        %v725 = vtanh.pop %v709
        %v726 = vtanh.pop %v710
        %v727 = vtanh.pop %v711
        %v728 = vtanh.pop %v712
        %v729 = vtanh.pop %v713
        %v730 = vtanh.pop %v714
        %v731 = vtanh.pop %v715
        %v732 = vtanh.pop %v716
        %v733 = vtanh.pop %v717
        %v734 = vtanh.pop %v718
        %735 = vmatpush.xpose.msra.mxu0 %v734
        %736 = vmatpush.xpose.msra.mxu0 %v733
        %737 = vmatpush.xpose.msra.mxu0 %v732
        %738 = vmatpush.xpose.msra.mxu0 %v731
        %739 = vmatpush.xpose.msra.mxu0 %v730
        %740 = vmatpush.xpose.msra.mxu0 %v729
        %741 = vmatpush.xpose.msra.mxu0 %v728
        %742 = vmatpush.xpose.msra.mxu0 %v727
        %743 = vmatpush.xpose.msra.mxu0 %v726
        %744 = vmatpush.xpose.msra.mxu0 %v725
        %745 = vmatpush.xpose.msra.mxu0 %v724
        %746 = vmatpush.xpose.msra.mxu0 %v723
        %747 = vmatpush.xpose.msra.mxu0 %v722
        %748 = vmatpush.xpose.msra.mxu0 %v721
        %749 = vmatpush.xpose.msra.mxu0 %v720
        %750 = vmatpush.xpose.msra.mxu0 %v719
        %751 = vmatmul.f32.gmra.mxu0 %v418
        %v752 = vpop.f32.mrf.mxu0
        %v753 = vadd.f32 0.0, %v752
        %754 = vdwg.mxu0
        %755 = vst [vmem:[#allocation2 + $0x3] sm:$0x1] %v753
        %v756 = vperm.slane %v457, 4
        %v757 = vadd.f32 %v756, %v493
        %v758 = vadd.f32 %v756, %v496
        %v759 = vadd.f32 %v756, %v499
        %v760 = vadd.f32 %v756, %v502
        %v761 = vadd.f32 %v756, %v505
        %v762 = vadd.f32 %v756, %v508
        %v763 = vadd.f32 %v756, %v511
        %v764 = vadd.f32 %v756, %v514
        %v765 = vadd.f32 %v756, %v517
        %v766 = vadd.f32 %v756, %v520
        %v767 = vadd.f32 %v756, %v523
        %v768 = vadd.f32 %v756, %v526
        %v769 = vadd.f32 %v756, %v529
        %v770 = vadd.f32 %v756, %v532
        %v771 = vadd.f32 %v756, %v535
        %v772 = vadd.f32 %v756, %v538
        %v773 = vtanh.pop %v757
        %v774 = vtanh.pop %v758
        %v775 = vtanh.pop %v759
        %v776 = vtanh.pop %v760
        %v777 = vtanh.pop %v761
        %v778 = vtanh.pop %v762
        %v779 = vtanh.pop %v763
        %v780 = vtanh.pop %v764
        %v781 = vtanh.pop %v765
        %v782 = vtanh.pop %v766
        %v783 = vtanh.pop %v767
        %v784 = vtanh.pop %v768
        %v785 = vtanh.pop %v769
        %v786 = vtanh.pop %v770
        %v787 = vtanh.pop %v771
        %v788 = vtanh.pop %v772
        %789 = vmatpush.xpose.msra.mxu0 %v788
        %790 = vmatpush.xpose.msra.mxu0 %v787
        %791 = vmatpush.xpose.msra.mxu0 %v786
        %792 = vmatpush.xpose.msra.mxu0 %v785
        %793 = vmatpush.xpose.msra.mxu0 %v784
        %794 = vmatpush.xpose.msra.mxu0 %v783
        %795 = vmatpush.xpose.msra.mxu0 %v782
        %796 = vmatpush.xpose.msra.mxu0 %v781
        %797 = vmatpush.xpose.msra.mxu0 %v780
        %798 = vmatpush.xpose.msra.mxu0 %v779
        %799 = vmatpush.xpose.msra.mxu0 %v778
        %800 = vmatpush.xpose.msra.mxu0 %v777
        %801 = vmatpush.xpose.msra.mxu0 %v776
        %802 = vmatpush.xpose.msra.mxu0 %v775
        %803 = vmatpush.xpose.msra.mxu0 %v774
        %804 = vmatpush.xpose.msra.mxu0 %v773
        %805 = vmatmul.f32.gmra.mxu0 %v418
        %v806 = vpop.f32.mrf.mxu0
        %v807 = vadd.f32 0.0, %v806
        %808 = vdwg.mxu0
        %809 = vst [vmem:[#allocation2 + $0x4] sm:$0x1] %v807
        %v810 = vperm.slane %v457, 5
        %v811 = vadd.f32 %v810, %v493
        %v812 = vadd.f32 %v810, %v496
        %v813 = vadd.f32 %v810, %v499
        %v814 = vadd.f32 %v810, %v502
        %v815 = vadd.f32 %v810, %v505
        %v816 = vadd.f32 %v810, %v508
        %v817 = vadd.f32 %v810, %v511
        %v818 = vadd.f32 %v810, %v514
        %v819 = vadd.f32 %v810, %v517
        %v820 = vadd.f32 %v810, %v520
        %v821 = vadd.f32 %v810, %v523
        %v822 = vadd.f32 %v810, %v526
        %v823 = vadd.f32 %v810, %v529
        %v824 = vadd.f32 %v810, %v532
        %v825 = vadd.f32 %v810, %v535
        %v826 = vadd.f32 %v810, %v538
        %v827 = vtanh.pop %v811
        %v828 = vtanh.pop %v812
        %v829 = vtanh.pop %v813
        %v830 = vtanh.pop %v814
        %v831 = vtanh.pop %v815
        %v832 = vtanh.pop %v816
        %v833 = vtanh.pop %v817
        %v834 = vtanh.pop %v818
        %v835 = vtanh.pop %v819
        %v836 = vtanh.pop %v820
        %v837 = vtanh.pop %v821
        %v838 = vtanh.pop %v822
        %v839 = vtanh.pop %v823
        %v840 = vtanh.pop %v824
        %v841 = vtanh.pop %v825
        %v842 = vtanh.pop %v826
        %843 = vmatpush.xpose.msra.mxu0 %v842
        %844 = vmatpush.xpose.msra.mxu0 %v841
        %845 = vmatpush.xpose.msra.mxu0 %v840
        %846 = vmatpush.xpose.msra.mxu0 %v839
        %847 = vmatpush.xpose.msra.mxu0 %v838
        %848 = vmatpush.xpose.msra.mxu0 %v837
        %849 = vmatpush.xpose.msra.mxu0 %v836
        %850 = vmatpush.xpose.msra.mxu0 %v835
        %851 = vmatpush.xpose.msra.mxu0 %v834
        %852 = vmatpush.xpose.msra.mxu0 %v833
        %853 = vmatpush.xpose.msra.mxu0 %v832
        %854 = vmatpush.xpose.msra.mxu0 %v831
        %855 = vmatpush.xpose.msra.mxu0 %v830
        %856 = vmatpush.xpose.msra.mxu0 %v829
        %857 = vmatpush.xpose.msra.mxu0 %v828
        %858 = vmatpush.xpose.msra.mxu0 %v827
        %859 = vmatmul.f32.gmra.mxu0 %v418
        %v860 = vpop.f32.mrf.mxu0
        %v861 = vadd.f32 0.0, %v860
        %862 = vdwg.mxu0
        %863 = vst [vmem:[#allocation2 + $0x5] sm:$0x1] %v861
        %v864 = vperm.slane %v457, 6
        %v865 = vadd.f32 %v864, %v493
        %v866 = vadd.f32 %v864, %v496
        %v867 = vadd.f32 %v864, %v499
        %v868 = vadd.f32 %v864, %v502
        %v869 = vadd.f32 %v864, %v505
        %v870 = vadd.f32 %v864, %v508
        %v871 = vadd.f32 %v864, %v511
        %v872 = vadd.f32 %v864, %v514
        %v873 = vadd.f32 %v864, %v517
        %v874 = vadd.f32 %v864, %v520
        %v875 = vadd.f32 %v864, %v523
        %v876 = vadd.f32 %v864, %v526
        %v877 = vadd.f32 %v864, %v529
        %v878 = vadd.f32 %v864, %v532
        %v879 = vadd.f32 %v864, %v535
        %v880 = vadd.f32 %v864, %v538
        %v881 = vtanh.pop %v865
        %v882 = vtanh.pop %v866
        %v883 = vtanh.pop %v867
        %v884 = vtanh.pop %v868
        %v885 = vtanh.pop %v869
        %v886 = vtanh.pop %v870
        %v887 = vtanh.pop %v871
        %v888 = vtanh.pop %v872
        %v889 = vtanh.pop %v873
        %v890 = vtanh.pop %v874
        %v891 = vtanh.pop %v875
        %v892 = vtanh.pop %v876
        %v893 = vtanh.pop %v877
        %v894 = vtanh.pop %v878
        %v895 = vtanh.pop %v879
        %v896 = vtanh.pop %v880
        %897 = vmatpush.xpose.msra.mxu0 %v896
        %898 = vmatpush.xpose.msra.mxu0 %v895
        %899 = vmatpush.xpose.msra.mxu0 %v894
        %900 = vmatpush.xpose.msra.mxu0 %v893
        %901 = vmatpush.xpose.msra.mxu0 %v892
        %902 = vmatpush.xpose.msra.mxu0 %v891
        %903 = vmatpush.xpose.msra.mxu0 %v890
        %904 = vmatpush.xpose.msra.mxu0 %v889
        %905 = vmatpush.xpose.msra.mxu0 %v888
        %906 = vmatpush.xpose.msra.mxu0 %v887
        %907 = vmatpush.xpose.msra.mxu0 %v886
        %908 = vmatpush.xpose.msra.mxu0 %v885
        %909 = vmatpush.xpose.msra.mxu0 %v884
        %910 = vmatpush.xpose.msra.mxu0 %v883
        %911 = vmatpush.xpose.msra.mxu0 %v882
        %912 = vmatpush.xpose.msra.mxu0 %v881
        %913 = vmatmul.f32.gmra.mxu0 %v418
        %v914 = vpop.f32.mrf.mxu0
        %v915 = vadd.f32 0.0, %v914
        %916 = vdwg.mxu0
        %917 = vst [vmem:[#allocation2 + $0x6] sm:$0x1] %v915
        %v918 = vperm.slane %v457, 7
        %v919 = vadd.f32 %v918, %v493
        %v920 = vadd.f32 %v918, %v496
        %v921 = vadd.f32 %v918, %v499
        %v922 = vadd.f32 %v918, %v502
        %v923 = vadd.f32 %v918, %v505
        %v924 = vadd.f32 %v918, %v508
        %v925 = vadd.f32 %v918, %v511
        %v926 = vadd.f32 %v918, %v514
        %v927 = vadd.f32 %v918, %v517
        %v928 = vadd.f32 %v918, %v520
        %v929 = vadd.f32 %v918, %v523
        %v930 = vadd.f32 %v918, %v526
        %v931 = vadd.f32 %v918, %v529
        %v932 = vadd.f32 %v918, %v532
        %v933 = vadd.f32 %v918, %v535
        %v934 = vadd.f32 %v918, %v538
        %v935 = vtanh.pop %v919
        %v936 = vtanh.pop %v920
        %v937 = vtanh.pop %v921
        %v938 = vtanh.pop %v922
        %v939 = vtanh.pop %v923
        %v940 = vtanh.pop %v924
        %v941 = vtanh.pop %v925
        %v942 = vtanh.pop %v926
        %v943 = vtanh.pop %v927
        %v944 = vtanh.pop %v928
        %v945 = vtanh.pop %v929
        %v946 = vtanh.pop %v930
        %v947 = vtanh.pop %v931
        %v948 = vtanh.pop %v932
        %v949 = vtanh.pop %v933
        %v950 = vtanh.pop %v934
        %951 = vmatpush.xpose.msra.mxu0 %v950
        %952 = vmatpush.xpose.msra.mxu0 %v949
        %953 = vmatpush.xpose.msra.mxu0 %v948
        %954 = vmatpush.xpose.msra.mxu0 %v947
        %955 = vmatpush.xpose.msra.mxu0 %v946
        %956 = vmatpush.xpose.msra.mxu0 %v945
        %957 = vmatpush.xpose.msra.mxu0 %v944
        %958 = vmatpush.xpose.msra.mxu0 %v943
        %959 = vmatpush.xpose.msra.mxu0 %v942
        %960 = vmatpush.xpose.msra.mxu0 %v941
        %961 = vmatpush.xpose.msra.mxu0 %v940
        %962 = vmatpush.xpose.msra.mxu0 %v939
        %963 = vmatpush.xpose.msra.mxu0 %v938
        %964 = vmatpush.xpose.msra.mxu0 %v937
        %965 = vmatpush.xpose.msra.mxu0 %v936
        %966 = vmatpush.xpose.msra.mxu0 %v935
        %967 = vmatmul.f32.gmra.mxu0 %v418
        %v968 = vpop.f32.mrf.mxu0
        %v969 = vadd.f32 0.0, %v968
        %970 = vdwg.mxu0
        %971 = vst [vmem:[#allocation2 + $0x7] sm:$0x1] %v969
        %v972 = vld [vmem:[#allocation2] sm:$0xff]
        %973 = vmax.xlane.f32.xlu0 %v972
        %v974 = vpop.xlane.xlu0 %973
        %v975 = vsub.f32 %v972, %v974
        %v976 = vmul.f32 %v975, 1.442695
        %v977 = vpow.pop %v976
        %978 = vadd.xlane.f32.xlu0 %v977
        %v979 = vpop.xlane.xlu0 %978
        %v980 = vrcp.pop %v979
        %v981 = vmul.f32 %v977, %v980
        %982 = vst [vmem:[%s400] sm:$0xff] %v981
        %983 = vmatpush.msra.mxu0 %v417
        %984 = vmatpush.msra.mxu0 %v416
        %985 = vmatpush.msra.mxu0 %v415
        %986 = vmatpush.msra.mxu0 %v414
        %987 = vmatpush.msra.mxu0 %v413
        %988 = vmatpush.msra.mxu0 %v412
        %989 = vmatpush.msra.mxu0 %v411
        %990 = vmatpush.msra.mxu0 %v410
        %991 = vmatpush.msra.mxu0 %v409
        %992 = vmatpush.msra.mxu0 %v408
        %993 = vmatpush.msra.mxu0 %v407
        %994 = vmatpush.msra.mxu0 %v406
        %995 = vmatpush.msra.mxu0 %v405
        %996 = vmatpush.msra.mxu0 %v404
        %997 = vmatpush.msra.mxu0 %v403
        %998 = vmatpush.msra.mxu0 %v402
        %999 = vmatmul.f32.gmra.mxu0 %v981
        %v1000 = vpop.f32.mrf.mxu0
        %v1001 = vadd.f32 0.0, %v1000
        %1002 = vdwg.mxu0
        %1003 = vst [vmem:[%s393] sm:$0xff] %v1001
        %s1004 = sand.u32 %s192, 1
        %s1005 = scalar_lea.sflag [#allocation5], %s1004
        %s1006 = sand.u32 %s192, 1
        %s1007 = smul.addr %s1006, 8
        %s1008 = scalar_lea.vmem [#allocation11], %s1007
        %s1009 = sand.u32 %s220, 1
        %s1010 = scalar_lea.sflag [#allocation13], %s1009
        %s1011 = sand.u32 %s220, 1
        %s1012 = smul.addr %s1011, 8
        %s1013 = scalar_lea.vmem [#allocation12], %s1012
        // Predicated region
        $region61: #{tpu_custom_call.1} parent=43 // pred_check
          %p1014 = pneg %p202
        $region62: #{tpu_custom_call.1} parent=43 // pred_check_branch
          %1016 = sbr.rel (%p1014) target = $region64
        $region63: #{tpu_custom_call.1} parent=43 // pred_region
          %1018 = vsyncadd %s1005, 0
          %s1019 = sadd.s32 %s37, %s36
          %s1020 = smul.addr %s1019, 8
          %s1021 = scalar_lea.hbm %s6, %s1020
          %s1023 = sshll.u32 %s1008, 4
          %s1024 = int_to_ptr.vmem [resolvable:$true] %s1023
          %s1025 = sshll.u32 %s1021, 4
          %s1026 = int_to_ptr.hbm [resolvable:$true] %s1025
          %1028 = dma.vmem_to_hbm [thread:$0]  %s1024, 128, %s1026, %s1005
        $region64: #{tpu_custom_call.1} parent=43 // pred_fallthru
          _
        // Predicated region
        $region65: #{tpu_custom_call.1} parent=43 // pred_check
          %p1029 = pneg %p230
        $region66: #{tpu_custom_call.1} parent=43 // pred_check_branch
          %1031 = sbr.rel (%p1029) target = $region68
        $region67: #{tpu_custom_call.1} parent=43 // pred_region
          %1033 = vsyncadd %s1010, 0
          %s1034 = sadd.s32 %s37, %s36
          %s1035 = smul.addr %s1034, 8
          %s1036 = scalar_lea.hbm %s7, %s1035
          %s1038 = sshll.u32 %s1013, 4
          %s1039 = int_to_ptr.vmem [resolvable:$true] %s1038
          %s1040 = sshll.u32 %s1036, 4
          %s1041 = int_to_ptr.hbm [resolvable:$true] %s1040
          %1043 = dma.vmem_to_hbm [thread:$0]  %s1039, 128, %s1041, %s1010
        $region68: #{tpu_custom_call.1} parent=43 // pred_fallthru
          _
      $region44: #{tpu_custom_call.1} parent=5 // pred_fallthru
        _
      %p1044 = scmp.le.s32.totalorder 2, %s27
      // Predicated region
      $region69: #{tpu_custom_call.1} parent=5 // pred_check
        %p1045 = pneg %p1044
      $region70: #{tpu_custom_call.1} parent=5 // pred_check_branch
        %1047 = sbr.rel (%p1045) target = $region72
      $region71: #{tpu_custom_call.1} parent=5 // pred_region
        %s1048 = ssub.s32 %s27, 2
        // Predicated region
        $region73: #{tpu_custom_call.1} parent=71 // pred_check
          %p1049 = pneg %p208
        $region74: #{tpu_custom_call.1} parent=71 // pred_check_branch
          %1051 = sbr.rel (%p1049) target = $region76
        $region75: #{tpu_custom_call.1} parent=71 // pred_region
          %s1052 = sand.u32 %s193, 1
          %s1053 = scalar_lea.sflag [#allocation5], %s1052
          %s1054 = sand.u32 %s193, 1
          %s1055 = smul.addr %s1054, 8
          %s1056 = scalar_lea.vmem [#allocation11], %s1055
          %1058 = dma.done %s1053, 128
        $region76: #{tpu_custom_call.1} parent=71 // pred_fallthru
          _
        // Predicated region
        $region77: #{tpu_custom_call.1} parent=71 // pred_check
          %p1059 = pneg %p236
        $region78: #{tpu_custom_call.1} parent=71 // pred_check_branch
          %1061 = sbr.rel (%p1059) target = $region80
        $region79: #{tpu_custom_call.1} parent=71 // pred_region
          %s1062 = sand.u32 %s221, 1
          %s1063 = scalar_lea.sflag [#allocation13], %s1062
          %s1064 = sand.u32 %s221, 1
          %s1065 = smul.addr %s1064, 8
          %s1066 = scalar_lea.vmem [#allocation12], %s1065
          %1068 = dma.done %s1063, 128
        $region80: #{tpu_custom_call.1} parent=71 // pred_fallthru
          _
      $region72: #{tpu_custom_call.1} parent=5 // pred_fallthru
        _
    $region6: #{tpu_custom_call.1} parent=1 // loop_footer
      %s31 = sadd.s32 1, %s27
    $region7: #{tpu_custom_call.1} parent=1 // loop_footer_branch
      %26 = sbr.rel target = $region3
    $region8: #{tpu_custom_call.1} parent=1 // loop_exit
      _
    %1069 = vsyncpa [#allocation4], 1
    %s1070 = scalar_lea.sflag [#allocation4], 1
    %1071 = vsyncpa %s1070, 1
    %1072 = vsyncpa [#allocation7], 1
    %s1073 = scalar_lea.sflag [#allocation7], 1
    %1074 = vsyncpa %s1073, 1
    %1075 = vsyncpa [#allocation10], 1
    %1076 = vsyncpa [#allocation5], 1
    %s1077 = scalar_lea.sflag [#allocation5], 1
    %1078 = vsyncpa %s1077, 1
    %1079 = vsyncpa [#allocation13], 1
    %s1080 = scalar_lea.sflag [#allocation13], 1
    %1081 = vsyncpa %s1080, 1

</llo_original>
